<compile_context>
chip_gen: v7x
topology: tpu7x:2x2x1
jax: 0.10.0
libtpu: 0.0.40
codegen_flags: <defaults>
</compile_context>

<pallas_src>
import math

import jax
import jax.numpy as jnp
from jax.experimental import pallas as pl
from jax.experimental.pallas import tpu as pltpu


_LANE = 128
# Conservative per-call working-set budget used when choosing tile sizes.
_VMEM_TILE_BUDGET = 24 << 20
# Scoped-VMEM limit requested from the compiler (safe on v5e/v6e/v7x).
_VMEM_LIMIT_BYTES = 32 << 20


def _round_up(x, m):
    return (x + m - 1) // m * m


def _pad2d(x, rows, cols):
    r, c = x.shape
    if (r, c) == (rows, cols):
        return x                      # no-op: avoids an extra HBM copy
    return jnp.pad(x, ((0, rows - r), (0, cols - c)))


def _tile_candidates(dim_p, pref):
    """Multiples of 128 that exactly divide dim_p, descending, capped at pref."""
    m = dim_p // _LANE
    cap = max(1, min(m, pref // _LANE))
    return sorted((_LANE * d for d in range(1, cap + 1) if m % d == 0),
                  reverse=True)


def _pick_tiles(Mp, Kp, Fp, a_item, b_item, out_item, use_scratch,
                tm_pref, tk_pref):
    # v7x megacore: keep >= 2 row tiles so both TensorCores get work.
    tm_cap = tm_pref if Mp < 2 * _LANE else min(tm_pref, Mp // 2)
    tm_cands = _tile_candidates(Mp, tm_cap)
    tk_cands = _tile_candidates(Kp, tk_pref)

    def working_set(tm, tk):
        ws = 2 * tm * tk * a_item          # A tiles, double-buffered
        ws += 2 * tk * Fp * b_item         # B stripe, double-buffered
        ws += 2 * tm * Fp * out_item       # resident output block (x2, conservative)
        ws += 2 * Fp * 4                   # bias
        if use_scratch:
            ws += tm * Fp * 4              # f32 accumulator scratch
        return ws

    for tm in tm_cands:
        for tk in tk_cands:
            if working_set(tm, tk) <= _VMEM_TILE_BUDGET:
                return tm, tk
    # Fall back to the smallest tiles; the explicit vmem_limit still applies.
    return tm_cands[-1], tk_cands[-1]


def _make_matmul_kernel(has_bias, acc_into_out):
    """Kernel body for one (row tile i, reduction tile k) grid step."""

    if acc_into_out:
        # f32 output block is resident across the k axis -> accumulate in place.
        def kernel(*refs):
            if has_bias:
                a_ref, b_ref, bias_ref, o_ref = refs
            else:
                a_ref, b_ref, o_ref = refs
            k = pl.program_id(1)

            @pl.when(k == 0)
            def _():
                o_ref[...] = jnp.zeros_like(o_ref)

            o_ref[...] += jnp.dot(a_ref[...], b_ref[...],
                                  preferred_element_type=jnp.float32)

            if has_bias:
                @pl.when(k == pl.num_programs(1) - 1)
                def _():
                    o_ref[...] += bias_ref[...]

        return kernel

    # Narrow (bf16) output: accumulate in f32 VMEM scratch, cast once at the end.
    def kernel(*refs):
        if has_bias:
            a_ref, b_ref, bias_ref, o_ref, acc_ref = refs
        else:
            a_ref, b_ref, o_ref, acc_ref = refs
        k = pl.program_id(1)

        @pl.when(k == 0)
        def _():
            acc_ref[...] = jnp.zeros_like(acc_ref)

        acc_ref[...] += jnp.dot(a_ref[...], b_ref[...],
                                preferred_element_type=jnp.float32)

        @pl.when(k == pl.num_programs(1) - 1)
        def _():
            res = acc_ref[...]
            if has_bias:
                res = res + bias_ref[...]
            o_ref[...] = res.astype(o_ref.dtype)

    return kernel


def _tiled_matmul_bias(a, b, bias, *, out_dtype=jnp.float32,
                       tm_pref=512, tk_pref=1024):
    """a @ b (+ bias) via a (row, reduction)-tiled Pallas MXU kernel.

    a: [M, K], b: [K, F], bias: [F] or None.  Returns [M, F] in out_dtype.
    Operands are padded only up to 128-alignment (exact along K -> no error);
    tiles divide the padded dims exactly, so no extra padded copy of `a`.
    """
    M, K = a.shape
    K2, F = b.shape
    assert K == K2, (a.shape, b.shape)

    Mp = _round_up(M, _LANE)
    Kp = _round_up(K, _LANE)
    Fp = _round_up(F, _LANE)

    a_item = jnp.dtype(a.dtype).itemsize
    b_item = jnp.dtype(b.dtype).itemsize
    out_item = jnp.dtype(out_dtype).itemsize

    acc_into_out = jnp.dtype(out_dtype) == jnp.dtype(jnp.float32)
    has_bias = bias is not None

    tm, tk = _pick_tiles(Mp, Kp, Fp, a_item, b_item, out_item,
                         use_scratch=not acc_into_out,
                         tm_pref=tm_pref, tk_pref=tk_pref)

    a_p = _pad2d(a, Mp, Kp)
    b_p = _pad2d(b, Kp, Fp)

    grid = (Mp // tm, Kp // tk)                       # reduction axis last

    in_specs = [
        pl.BlockSpec((tm, tk), lambda i, k: (i, k)),  # A tile
        pl.BlockSpec((tk, Fp), lambda i, k: (k, 0)),  # B stripe (lane-dense)
    ]
    operands = [a_p, b_p]
    if has_bias:
        bias_p = _pad2d(bias.reshape(1, F).astype(jnp.float32), 1, Fp)
        in_specs.append(pl.BlockSpec((1, Fp), lambda i, k: (0, 0)))
        operands.append(bias_p)

    scratch_shapes = []
    if not acc_into_out:
        scratch_shapes.append(pltpu.VMEM((tm, Fp), jnp.float32))

    cost = pl.CostEstimate(
        flops=2 * Mp * Kp * Fp,
        transcendentals=0,
        bytes_accessed=(a_p.size * a_item
                        + (Mp // tm) * b_p.size * b_item
                        + Mp * Fp * out_item),
    )

    out_p = pl.pallas_call(
        _make_matmul_kernel(has_bias, acc_into_out),
        out_shape=jax.ShapeDtypeStruct((Mp, Fp), out_dtype),
        grid=grid,
        in_specs=in_specs,
        out_specs=pl.BlockSpec((tm, Fp), lambda i, k: (i, 0)),
        scratch_shapes=scratch_shapes,
        compiler_params=pltpu.CompilerParams(
            dimension_semantics=("parallel", "arbitrary"),
            vmem_limit_bytes=_VMEM_LIMIT_BYTES,
        ),
        cost_estimate=cost,
    )(*operands)

    if (Mp, Fp) == (M, F):
        return out_p
    return out_p[:M, :F]


def graph_convolution(x, adj, weight, bias=None, *, compute_dtype=jnp.bfloat16,
                      tm_pref=512, tk_pref=1024):
    """GCN forward: adj @ (x @ weight) + bias, via tiled Pallas matmuls."""
    N, in_f = x.shape
    in_f2, out_f = weight.shape
    assert in_f == in_f2
    assert adj.shape == (N, N)

    x_c = x.astype(compute_dtype)
    adj_c = adj.astype(compute_dtype)
    w_c = weight.astype(compute_dtype)

    if in_f >= out_f:
        # support = x @ w (small, computed once, emitted directly in
        # compute_dtype), then out = adj @ support + bias (big tiled matmul).
        support = _tiled_matmul_bias(x_c, w_c, None, out_dtype=compute_dtype,
                                     tm_pref=tm_pref, tk_pref=tk_pref)
        out = _tiled_matmul_bias(adj_c, support, bias, out_dtype=jnp.float32,
                                 tm_pref=tm_pref, tk_pref=tk_pref)
    else:
        # Cheaper associativity when out_f > in_f: (adj @ x) @ w + bias.
        ax = _tiled_matmul_bias(adj_c, x_c, None, out_dtype=compute_dtype,
                                tm_pref=tm_pref, tk_pref=tk_pref)
        out = _tiled_matmul_bias(ax, w_c, bias, out_dtype=jnp.float32,
                                 tm_pref=tm_pref, tk_pref=tk_pref)
    return out


def init_params(key, in_features, out_features, gain=0.02):
    """Xavier-normal weight (gain=0.02, matching reset_parameters_xavier),
    zero bias — deterministic given the key."""
    std = gain * math.sqrt(2.0 / float(in_features + out_features))
    w = std * jax.random.normal(key, (in_features, out_features), dtype=jnp.float32)
    b = jnp.zeros((out_features,), dtype=jnp.float32)
    return w, b


if __name__ == "__main__":
    key = jax.random.PRNGKey(0)
    k_x, k_adj, k_w, k_x2, k_adj2, k_w2 = jax.random.split(key, 6)

    # ---- Case 1: tiny graph, both f32 exact path and bf16 fast path --------
    N, in_features, out_features = 8, 16, 32
    x = jax.random.normal(k_x, (N, in_features), dtype=jnp.float32)
    adj_raw = jax.random.uniform(k_adj, (N, N), dtype=jnp.float32)
    adj = adj_raw / jnp.sum(adj_raw, axis=1, keepdims=True)   # row-normalized
    weight, bias = init_params(k_w, in_features, out_features)

    ref = adj @ (x @ weight) + bias

    out_f32 = jax.block_until_ready(
        graph_convolution(x, adj, weight, bias, compute_dtype=jnp.float32))
    assert out_f32.shape == (N, out_features)
    assert jnp.allclose(out_f32, ref, atol=1e-5, rtol=1e-5), "f32 mismatch"

    out_bf16 = jax.block_until_ready(graph_convolution(x, adj, weight, bias))
    assert out_bf16.shape == (N, out_features)
    assert jnp.allclose(out_bf16, ref, atol=1e-3, rtol=5e-2), "bf16 mismatch"

    # ---- Case 2: multi-tile grid (3 row tiles x 3 reduction tiles), no bias,
    #      other associativity branch (in_f < out_f) ---------------------------
    N2, in_f2, out_f2 = 384, 96, 160
    x2 = jax.random.normal(k_x2, (N2, in_f2), dtype=jnp.float32)
    adj2_raw = jax.random.uniform(k_adj2, (N2, N2), dtype=jnp.float32)
    adj2 = adj2_raw / jnp.sum(adj2_raw, axis=1, keepdims=True)
    w2 = 0.1 * jax.random.normal(k_w2, (in_f2, out_f2), dtype=jnp.float32)

    ref2 = jnp.dot(adj2, jnp.dot(x2, w2, precision="highest"),
                   precision="highest")
    out2 = jax.block_until_ready(
        graph_convolution(x2, adj2, w2, None, compute_dtype=jnp.float32,
                          tm_pref=128, tk_pref=128))
    assert out2.shape == (N2, out_f2)
    assert jnp.allclose(out2, ref2, atol=1e-4, rtol=1e-3), "multi-tile mismatch"

    print("KERNEL_OK")
</pallas_src>

<mosaic_0001>
module attributes {stable_mosaic.version = 11 : i64} {
  func.func @kernel(%arg0: i32, %arg1: i32, %arg2: memref<128x128xf32, #tpu.memory_space<vmem>>, %arg3: memref<128x128xf32, #tpu.memory_space<vmem>>, %arg4: memref<128x128xf32, #tpu.memory_space<vmem>>) attributes {dimension_semantics = [#tpu.dimension_semantics<parallel>, #tpu.dimension_semantics<arbitrary>], iteration_bounds = array<i64: 1, 1>, scalar_prefetch = 0 : i64, scratch_operands = 0 : i64, tpu.core_type = #tpu.core_type<tc>, window_params = [{transform_indices = @transform_0, window_bounds = array<i64: 128, 128>}, {transform_indices = @transform_1, window_bounds = array<i64: 128, 128>}, {transform_indices = @transform_2, window_bounds = array<i64: 128, 128>}]} {
    %c0_i32 = arith.constant 0 : i32
    %0 = arith.cmpi eq, %arg1, %c0_i32 : i32
    %1 = arith.extui %0 : i1 to i32
    %c0_i32_0 = arith.constant 0 : i32
    %2 = arith.cmpi ne, %1, %c0_i32_0 : i32
    scf.if %2 {
      %cst_8 = arith.constant 0.000000e+00 : f32
      %9 = vector.broadcast %cst_8 : f32 to vector<128x128xf32>
      %c0_9 = arith.constant 0 : index
      %c0_10 = arith.constant 0 : index
      %10 = vector.load %arg4[%c0_9, %c0_10] : memref<128x128xf32, #tpu.memory_space<vmem>>, vector<128x128xf32>
      tpu.vector_store %arg4[%c0_9, %c0_10], %9 {strides = array<i32>} : memref<128x128xf32, #tpu.memory_space<vmem>>, vector<128x128xf32>,
    } else {
    }
    %c0 = arith.constant 0 : index
    %c0_1 = arith.constant 0 : index
    %3 = vector.load %arg4[%c0, %c0_1] : memref<128x128xf32, #tpu.memory_space<vmem>>, vector<128x128xf32>
    %c0_2 = arith.constant 0 : index
    %c0_3 = arith.constant 0 : index
    %4 = vector.load %arg2[%c0_2, %c0_3] : memref<128x128xf32, #tpu.memory_space<vmem>>, vector<128x128xf32>
    %c0_4 = arith.constant 0 : index
    %c0_5 = arith.constant 0 : index
    %5 = vector.load %arg3[%c0_4, %c0_5] : memref<128x128xf32, #tpu.memory_space<vmem>>, vector<128x128xf32>
    %cst = arith.constant dense<0.000000e+00> : vector<128x128xf32>
    %6 = tpu.matmul %4, %5, %cst {dimension_numbers = #tpu.dot_dimension_numbers<[1], [0], [0], [1], [0, 0, 1, 1], [], []>} : vector<128x128xf32>, vector<128x128xf32>, vector<128x128xf32> -> vector<128x128xf32>
    %7 = arith.addf %3, %6 : vector<128x128xf32>
    %c0_6 = arith.constant 0 : index
    %c0_7 = arith.constant 0 : index
    %8 = vector.load %arg4[%c0_6, %c0_7] : memref<128x128xf32, #tpu.memory_space<vmem>>, vector<128x128xf32>
    tpu.vector_store %arg4[%c0_6, %c0_7], %7 {strides = array<i32>} : memref<128x128xf32, #tpu.memory_space<vmem>>, vector<128x128xf32>,
    return
  }
  func.func @transform_0(%arg0: i32, %arg1: i32) -> (i32, i32) {
    %c0_i32 = arith.constant 0 : i32
    return %arg0, %arg1 : i32, i32
  }
  func.func @transform_1(%arg0: i32, %arg1: i32) -> (i32, i32) {
    %c0_i32 = arith.constant 0 : i32
    %c0_i32_0 = arith.constant 0 : i32
    return %arg1, %c0_i32 : i32, i32
  }
  func.func @transform_2(%arg0: i32, %arg1: i32) -> (i32, i32) {
    %c0_i32 = arith.constant 0 : i32
    %c0_i32_0 = arith.constant 0 : i32
    return %arg0, %c0_i32 : i32, i32
  }
}

</mosaic_0001>

<llo_original>
// kernel: tpu_custom_call.1
$region0: #{tpu_custom_call.1}
  #allocation0 [shape = 'u32[]', space=smem, size = 0x4, offset = 0x4, fixed_abs, tag = 'smem constant byte address 0x4 - core index']
  #allocation1 [shape = 'u32[144,128]{1,0:T(1,128)}', space=vmem, size = 0x12000, scoped, tag = 'internal scratch']
  %s0 = inlined_call_operand.hbm [shape: f32[128,128], index: 0, kind: input, shape index: {}]
  %s1 = inlined_call_operand.hbm [shape: f32[128,128], index: 1, kind: input, shape index: {}]
  %s2 = inlined_call_operand.hbm [shape: f32[128,128], index: 2, kind: output, shape index: {}]
  %s3 = sld [smem:[#allocation0]]
  $region30: #{tpu_custom_call.1} parent=0
    _
  %s5 = ssub.s32 1, %s3
  %s6 = scalar_select 0, %s5, %s3
  $region1: #{tpu_custom_call.1} parent=0
    #allocation2 [shape = 'u8[65536]{0}', space=vmem, size = 0x10000, scoped, tag = 'input window, operand 0, single buffered']
    #allocation3 [shape = 's32[1]{0}', space=sflag, size = 0x4, scoped, tag = 'scoped memory for tpu_custom_call.1']
    #allocation4 [shape = 's32[1]{0}', space=sflag, size = 0x4, scoped, tag = 'scoped memory for tpu_custom_call.1']
    #allocation5 [shape = 'u8[65536]{0}', space=vmem, size = 0x10000, scoped, tag = 'input window, operand 1, single buffered']
    #allocation6 [shape = 's32[1]{0}', space=sflag, size = 0x4, scoped, tag = 'scoped memory for tpu_custom_call.1']
    #allocation7 [shape = 'u8[65536]{0}', space=vmem, size = 0x10000, scoped, tag = 'output window, operand 0, single buffered']
    %7 = vsyncpa [#allocation3], 0
    %8 = vsyncpa [#allocation6], 0
    %9 = vsyncpa [#allocation4], 0
    // Predicated region
    $region2: #{tpu_custom_call.1} parent=1 // pred_check
      _
    $region3: #{tpu_custom_call.1} parent=1 // pred_check_branch
      %11 = sbr.rel (0) target = $region5
    $region4: #{tpu_custom_call.1} parent=1 // pred_region
      %s13 = ssub.s32 2048, 2048
      %14 = vsyncadd [#allocation3], %s13
      %s15 = sshll.u32 [#allocation2], 4
      %s16 = int_to_ptr.vmem [resolvable:$true] %s15
      %21 = dma.hbm_to_vmem [thread:$0]  %s0, 2048, %s16, [#allocation3], 128, 128, 8
    $region5: #{tpu_custom_call.1} parent=1 // pred_fallthru
      _
    // Predicated region
    $region6: #{tpu_custom_call.1} parent=1 // pred_check
      _
    $region7: #{tpu_custom_call.1} parent=1 // pred_check_branch
      %23 = sbr.rel (0) target = $region9
    $region8: #{tpu_custom_call.1} parent=1 // pred_region
      %s25 = ssub.s32 2048, 2048
      %26 = vsyncadd [#allocation6], %s25
      %s27 = sshll.u32 [#allocation5], 4
      %s28 = int_to_ptr.vmem [resolvable:$true] %s27
      %33 = dma.hbm_to_vmem [thread:$0]  %s1, 2048, %s28, [#allocation6], 128, 128, 8
    $region9: #{tpu_custom_call.1} parent=1 // pred_fallthru
      _
    // Predicated region
    $region10: #{tpu_custom_call.1} parent=1 // pred_check
      _
    $region11: #{tpu_custom_call.1} parent=1 // pred_check_branch
      %35 = sbr.rel (0) target = $region13
    $region12: #{tpu_custom_call.1} parent=1 // pred_region
      %36 = dma.done [#allocation3], 2048
    $region13: #{tpu_custom_call.1} parent=1 // pred_fallthru
      _
    // Predicated region
    $region14: #{tpu_custom_call.1} parent=1 // pred_check
      _
    $region15: #{tpu_custom_call.1} parent=1 // pred_check_branch
      %38 = sbr.rel (0) target = $region17
    $region16: #{tpu_custom_call.1} parent=1 // pred_region
      %39 = dma.done [#allocation6], 2048
    $region17: #{tpu_custom_call.1} parent=1 // pred_fallthru
      _
    %p40 = scmp.eq.s32.totalorder 0, 0
    // Predicated region
    $region18: #{tpu_custom_call.1} parent=1 // pred_check
      %p41 = pneg %p40
    $region19: #{tpu_custom_call.1} parent=1 // pred_check_branch
      %43 = sbr.rel (%p41) target = $region21
    $region20: #{tpu_custom_call.1} parent=1 // pred_region
      %44 = vst [vmem:[#allocation7] sm:$0xff] 0.0
      %45 = vst [vmem:[#allocation7 + $0x8] sm:$0xff] 0.0
      %46 = vst [vmem:[#allocation7 + $0x10] sm:$0xff] 0.0
      %47 = vst [vmem:[#allocation7 + $0x18] sm:$0xff] 0.0
      %48 = vst [vmem:[#allocation7 + $0x20] sm:$0xff] 0.0
      %49 = vst [vmem:[#allocation7 + $0x28] sm:$0xff] 0.0
      %50 = vst [vmem:[#allocation7 + $0x30] sm:$0xff] 0.0
      %51 = vst [vmem:[#allocation7 + $0x38] sm:$0xff] 0.0
      %52 = vst [vmem:[#allocation7 + $0x40] sm:$0xff] 0.0
      %53 = vst [vmem:[#allocation7 + $0x48] sm:$0xff] 0.0
      %54 = vst [vmem:[#allocation7 + $0x50] sm:$0xff] 0.0
      %55 = vst [vmem:[#allocation7 + $0x58] sm:$0xff] 0.0
      %56 = vst [vmem:[#allocation7 + $0x60] sm:$0xff] 0.0
      %57 = vst [vmem:[#allocation7 + $0x68] sm:$0xff] 0.0
      %58 = vst [vmem:[#allocation7 + $0x70] sm:$0xff] 0.0
      %59 = vst [vmem:[#allocation7 + $0x78] sm:$0xff] 0.0
    $region21: #{tpu_custom_call.1} parent=1 // pred_fallthru
      _
    %v60 = vld [vmem:[#allocation7] sm:$0xff]
    %v61 = vld [vmem:[#allocation7 + $0x8] sm:$0xff]
    %v62 = vld [vmem:[#allocation7 + $0x10] sm:$0xff]
    %v63 = vld [vmem:[#allocation7 + $0x18] sm:$0xff]
    %v64 = vld [vmem:[#allocation7 + $0x20] sm:$0xff]
    %v65 = vld [vmem:[#allocation7 + $0x28] sm:$0xff]
    %v66 = vld [vmem:[#allocation7 + $0x30] sm:$0xff]
    %v67 = vld [vmem:[#allocation7 + $0x38] sm:$0xff]
    %v68 = vld [vmem:[#allocation7 + $0x40] sm:$0xff]
    %v69 = vld [vmem:[#allocation7 + $0x48] sm:$0xff]
    %v70 = vld [vmem:[#allocation7 + $0x50] sm:$0xff]
    %v71 = vld [vmem:[#allocation7 + $0x58] sm:$0xff]
    %v72 = vld [vmem:[#allocation7 + $0x60] sm:$0xff]
    %v73 = vld [vmem:[#allocation7 + $0x68] sm:$0xff]
    %v74 = vld [vmem:[#allocation7 + $0x70] sm:$0xff]
    %v75 = vld [vmem:[#allocation7 + $0x78] sm:$0xff]
    %v76 = vld [vmem:[#allocation2] sm:$0xff]
    %v77 = vld [vmem:[#allocation2 + $0x8] sm:$0xff]
    %v78 = vld [vmem:[#allocation2 + $0x10] sm:$0xff]
    %v79 = vld [vmem:[#allocation2 + $0x18] sm:$0xff]
    %v80 = vld [vmem:[#allocation2 + $0x20] sm:$0xff]
    %v81 = vld [vmem:[#allocation2 + $0x28] sm:$0xff]
    %v82 = vld [vmem:[#allocation2 + $0x30] sm:$0xff]
    %v83 = vld [vmem:[#allocation2 + $0x38] sm:$0xff]
    %v84 = vld [vmem:[#allocation2 + $0x40] sm:$0xff]
    %v85 = vld [vmem:[#allocation2 + $0x48] sm:$0xff]
    %v86 = vld [vmem:[#allocation2 + $0x50] sm:$0xff]
    %v87 = vld [vmem:[#allocation2 + $0x58] sm:$0xff]
    %v88 = vld [vmem:[#allocation2 + $0x60] sm:$0xff]
    %v89 = vld [vmem:[#allocation2 + $0x68] sm:$0xff]
    %v90 = vld [vmem:[#allocation2 + $0x70] sm:$0xff]
    %v91 = vld [vmem:[#allocation2 + $0x78] sm:$0xff]
    %v92 = vld [vmem:[#allocation5] sm:$0xff]
    %v93 = vld [vmem:[#allocation5 + $0x8] sm:$0xff]
    %v94 = vld [vmem:[#allocation5 + $0x10] sm:$0xff]
    %v95 = vld [vmem:[#allocation5 + $0x18] sm:$0xff]
    %v96 = vld [vmem:[#allocation5 + $0x20] sm:$0xff]
    %v97 = vld [vmem:[#allocation5 + $0x28] sm:$0xff]
    %v98 = vld [vmem:[#allocation5 + $0x30] sm:$0xff]
    %v99 = vld [vmem:[#allocation5 + $0x38] sm:$0xff]
    %v100 = vld [vmem:[#allocation5 + $0x40] sm:$0xff]
    %v101 = vld [vmem:[#allocation5 + $0x48] sm:$0xff]
    %v102 = vld [vmem:[#allocation5 + $0x50] sm:$0xff]
    %v103 = vld [vmem:[#allocation5 + $0x58] sm:$0xff]
    %v104 = vld [vmem:[#allocation5 + $0x60] sm:$0xff]
    %v105 = vld [vmem:[#allocation5 + $0x68] sm:$0xff]
    %v106 = vld [vmem:[#allocation5 + $0x70] sm:$0xff]
    %v107 = vld [vmem:[#allocation5 + $0x78] sm:$0xff]
    %108 = vmatprep.subr.mxu0 0.0
    %109 = vmatpush1.msra.mxu0 %v92
    %110 = vmatprep.subr.mxu0 0.0
    %111 = vmatpush1.msra.mxu0 %v93
    %112 = vmatprep.subr.mxu0 0.0
    %113 = vmatpush1.msra.mxu0 %v94
    %114 = vmatprep.subr.mxu0 0.0
    %115 = vmatpush1.msra.mxu0 %v95
    %116 = vmatprep.subr.mxu0 0.0
    %117 = vmatpush1.msra.mxu0 %v96
    %118 = vmatprep.subr.mxu0 0.0
    %119 = vmatpush1.msra.mxu0 %v97
    %120 = vmatprep.subr.mxu0 0.0
    %121 = vmatpush1.msra.mxu0 %v98
    %122 = vmatprep.subr.mxu0 0.0
    %123 = vmatpush1.msra.mxu0 %v99
    %124 = vmatprep.subr.mxu0 0.0
    %125 = vmatpush1.msra.mxu0 %v100
    %126 = vmatprep.subr.mxu0 0.0
    %127 = vmatpush1.msra.mxu0 %v101
    %128 = vmatprep.subr.mxu0 0.0
    %129 = vmatpush1.msra.mxu0 %v102
    %130 = vmatprep.subr.mxu0 0.0
    %131 = vmatpush1.msra.mxu0 %v103
    %132 = vmatprep.subr.mxu0 0.0
    %133 = vmatpush1.msra.mxu0 %v104
    %134 = vmatprep.subr.mxu0 0.0
    %135 = vmatpush1.msra.mxu0 %v105
    %136 = vmatprep.subr.mxu0 0.0
    %137 = vmatpush1.msra.mxu0 %v106
    %138 = vmatprep.subr.mxu0 0.0
    %139 = vmatpush1.msra.mxu0 %v107
    %140 = vmatprep.subr.mxu0 0.0
    %141 = vmatpush1.msra.mxu0 0.0
    %142 = vmatprep.subr.mxu0 0.0
    %143 = vmatpush1.msra.mxu0 0.0
    %144 = vmatprep.subr.mxu0 0.0
    %145 = vmatpush1.msra.mxu0 0.0
    %146 = vmatprep.subr.mxu0 0.0
    %147 = vmatpush1.msra.mxu0 0.0
    %148 = vmatprep.subr.mxu0 0.0
    %149 = vmatpush1.msra.mxu0 0.0
    %150 = vmatprep.subr.mxu0 0.0
    %151 = vmatpush1.msra.mxu0 0.0
    %152 = vmatprep.subr.mxu0 0.0
    %153 = vmatpush1.msra.mxu0 0.0
    %154 = vmatprep.subr.mxu0 0.0
    %155 = vmatpush1.msra.mxu0 0.0
    %156 = vmatprep.subr.mxu0 0.0
    %157 = vmatpush1.msra.mxu0 0.0
    %158 = vmatprep.subr.mxu0 0.0
    %159 = vmatpush1.msra.mxu0 0.0
    %160 = vmatprep.subr.mxu0 0.0
    %161 = vmatpush1.msra.mxu0 0.0
    %162 = vmatprep.subr.mxu0 0.0
    %163 = vmatpush1.msra.mxu0 0.0
    %164 = vmatprep.subr.mxu0 0.0
    %165 = vmatpush1.msra.mxu0 0.0
    %166 = vmatprep.subr.mxu0 0.0
    %167 = vmatpush1.msra.mxu0 0.0
    %168 = vmatprep.subr.mxu0 0.0
    %169 = vmatpush1.msra.mxu0 0.0
    %170 = vmatprep.subr.mxu0 0.0
    %171 = vmatpush1.msra.mxu0 0.0
    %172 = vmatprep.mubr.f32.mxu0 0.0
    %173 = vmatmul.mubr.f32.gmra.mrb[0].mxu0 %v76
    %v174 = vpop.f32.mrb[0].mxu0
    %v175 = vadd.f32 0.0, %v174
    %v176 = vpop.f32.mrb[0].mxu0
    %177 = vmatprep.mubr.f32.mxu0 0.0
    %178 = vmatmul.mubr.f32.gmra.mrb[0].mxu0 %v77
    %v179 = vpop.f32.mrb[0].mxu0
    %v180 = vadd.f32 0.0, %v179
    %v181 = vpop.f32.mrb[0].mxu0
    %182 = vmatprep.mubr.f32.mxu0 0.0
    %183 = vmatmul.mubr.f32.gmra.mrb[0].mxu0 %v78
    %v184 = vpop.f32.mrb[0].mxu0
    %v185 = vadd.f32 0.0, %v184
    %v186 = vpop.f32.mrb[0].mxu0
    %187 = vmatprep.mubr.f32.mxu0 0.0
    %188 = vmatmul.mubr.f32.gmra.mrb[0].mxu0 %v79
    %v189 = vpop.f32.mrb[0].mxu0
    %v190 = vadd.f32 0.0, %v189
    %v191 = vpop.f32.mrb[0].mxu0
    %192 = vmatprep.mubr.f32.mxu0 0.0
    %193 = vmatmul.mubr.f32.gmra.mrb[0].mxu0 %v80
    %v194 = vpop.f32.mrb[0].mxu0
    %v195 = vadd.f32 0.0, %v194
    %v196 = vpop.f32.mrb[0].mxu0
    %197 = vmatprep.mubr.f32.mxu0 0.0
    %198 = vmatmul.mubr.f32.gmra.mrb[0].mxu0 %v81
    %v199 = vpop.f32.mrb[0].mxu0
    %v200 = vadd.f32 0.0, %v199
    %v201 = vpop.f32.mrb[0].mxu0
    %202 = vmatprep.mubr.f32.mxu0 0.0
    %203 = vmatmul.mubr.f32.gmra.mrb[0].mxu0 %v82
    %v204 = vpop.f32.mrb[0].mxu0
    %v205 = vadd.f32 0.0, %v204
    %v206 = vpop.f32.mrb[0].mxu0
    %207 = vmatprep.mubr.f32.mxu0 0.0
    %208 = vmatmul.mubr.f32.gmra.mrb[0].mxu0 %v83
    %v209 = vpop.f32.mrb[0].mxu0
    %v210 = vadd.f32 0.0, %v209
    %v211 = vpop.f32.mrb[0].mxu0
    %212 = vmatprep.mubr.f32.mxu0 0.0
    %213 = vmatmul.mubr.f32.gmra.mrb[0].mxu0 %v84
    %v214 = vpop.f32.mrb[0].mxu0
    %v215 = vadd.f32 0.0, %v214
    %v216 = vpop.f32.mrb[0].mxu0
    %217 = vmatprep.mubr.f32.mxu0 0.0
    %218 = vmatmul.mubr.f32.gmra.mrb[0].mxu0 %v85
    %v219 = vpop.f32.mrb[0].mxu0
    %v220 = vadd.f32 0.0, %v219
    %v221 = vpop.f32.mrb[0].mxu0
    %222 = vmatprep.mubr.f32.mxu0 0.0
    %223 = vmatmul.mubr.f32.gmra.mrb[0].mxu0 %v86
    %v224 = vpop.f32.mrb[0].mxu0
    %v225 = vadd.f32 0.0, %v224
    %v226 = vpop.f32.mrb[0].mxu0
    %227 = vmatprep.mubr.f32.mxu0 0.0
    %228 = vmatmul.mubr.f32.gmra.mrb[0].mxu0 %v87
    %v229 = vpop.f32.mrb[0].mxu0
    %v230 = vadd.f32 0.0, %v229
    %v231 = vpop.f32.mrb[0].mxu0
    %232 = vmatprep.mubr.f32.mxu0 0.0
    %233 = vmatmul.mubr.f32.gmra.mrb[0].mxu0 %v88
    %v234 = vpop.f32.mrb[0].mxu0
    %v235 = vadd.f32 0.0, %v234
    %v236 = vpop.f32.mrb[0].mxu0
    %237 = vmatprep.mubr.f32.mxu0 0.0
    %238 = vmatmul.mubr.f32.gmra.mrb[0].mxu0 %v89
    %v239 = vpop.f32.mrb[0].mxu0
    %v240 = vadd.f32 0.0, %v239
    %v241 = vpop.f32.mrb[0].mxu0
    %242 = vmatprep.mubr.f32.mxu0 0.0
    %243 = vmatmul.mubr.f32.gmra.mrb[0].mxu0 %v90
    %v244 = vpop.f32.mrb[0].mxu0
    %v245 = vadd.f32 0.0, %v244
    %v246 = vpop.f32.mrb[0].mxu0
    %247 = vmatprep.mubr.f32.mxu0 0.0
    %248 = vmatmul.mubr.f32.gmra.mrb[0].mxu0 %v91
    %v249 = vpop.f32.mrb[0].mxu0
    %v250 = vadd.f32 0.0, %v249
    %v251 = vpop.f32.mrb[0].mxu0
    %252 = vdwg.mxu0
    %v253 = vadd.f32 %v60, %v175
    %v254 = vadd.f32 %v61, %v180
    %v255 = vadd.f32 %v62, %v185
    %v256 = vadd.f32 %v63, %v190
    %v257 = vadd.f32 %v64, %v195
    %v258 = vadd.f32 %v65, %v200
    %v259 = vadd.f32 %v66, %v205
    %v260 = vadd.f32 %v67, %v210
    %v261 = vadd.f32 %v68, %v215
    %v262 = vadd.f32 %v69, %v220
    %v263 = vadd.f32 %v70, %v225
    %v264 = vadd.f32 %v71, %v230
    %v265 = vadd.f32 %v72, %v235
    %v266 = vadd.f32 %v73, %v240
    %v267 = vadd.f32 %v74, %v245
    %v268 = vadd.f32 %v75, %v250
    %269 = vst [vmem:[#allocation7] sm:$0xff] %v253
    %270 = vst [vmem:[#allocation7 + $0x8] sm:$0xff] %v254
    %271 = vst [vmem:[#allocation7 + $0x10] sm:$0xff] %v255
    %272 = vst [vmem:[#allocation7 + $0x18] sm:$0xff] %v256
    %273 = vst [vmem:[#allocation7 + $0x20] sm:$0xff] %v257
    %274 = vst [vmem:[#allocation7 + $0x28] sm:$0xff] %v258
    %275 = vst [vmem:[#allocation7 + $0x30] sm:$0xff] %v259
    %276 = vst [vmem:[#allocation7 + $0x38] sm:$0xff] %v260
    %277 = vst [vmem:[#allocation7 + $0x40] sm:$0xff] %v261
    %278 = vst [vmem:[#allocation7 + $0x48] sm:$0xff] %v262
    %279 = vst [vmem:[#allocation7 + $0x50] sm:$0xff] %v263
    %280 = vst [vmem:[#allocation7 + $0x58] sm:$0xff] %v264
    %281 = vst [vmem:[#allocation7 + $0x60] sm:$0xff] %v265
    %282 = vst [vmem:[#allocation7 + $0x68] sm:$0xff] %v266
    %283 = vst [vmem:[#allocation7 + $0x70] sm:$0xff] %v267
    %284 = vst [vmem:[#allocation7 + $0x78] sm:$0xff] %v268
    // Predicated region
    $region22: #{tpu_custom_call.1} parent=1 // pred_check
      _
    $region23: #{tpu_custom_call.1} parent=1 // pred_check_branch
      %286 = sbr.rel (0) target = $region25
    $region24: #{tpu_custom_call.1} parent=1 // pred_region
      %s288 = ssub.s32 2048, 2048
      %289 = vsyncadd [#allocation4], %s288
      %s290 = sshll.u32 [#allocation7], 4
      %s291 = int_to_ptr.vmem [resolvable:$true] %s290
      %296 = dma.vmem_to_hbm [thread:$0]  %s291, 2048, %s2, [#allocation4], 128, 128, 8
    $region25: #{tpu_custom_call.1} parent=1 // pred_fallthru
      _
    // Predicated region
    $region26: #{tpu_custom_call.1} parent=1 // pred_check
      _
    $region27: #{tpu_custom_call.1} parent=1 // pred_check_branch
      %298 = sbr.rel (0) target = $region29
    $region28: #{tpu_custom_call.1} parent=1 // pred_region
      %299 = dma.done [#allocation4], 2048
    $region29: #{tpu_custom_call.1} parent=1 // pred_fallthru
      _
    %300 = vsyncpa [#allocation3], 1
    %301 = vsyncpa [#allocation6], 1
    %302 = vsyncpa [#allocation4], 1

</llo_original>
